<compile_context>
chip_gen: v7x
topology: tpu7x:2x2x1
jax: 0.10.0
libtpu: 0.0.40
codegen_flags: <defaults>
</compile_context>

<pallas_src>
import math
import functools

import jax
import jax.numpy as jnp
from jax.experimental import pallas as pl
from jax.experimental.pallas import tpu as pltpu


def _msa_head_kernel(x1_ref, x2_ref, wq_ref, wk_ref, wv_ref, mask_ref, out_ref,
                     *, approx_reciprocal):
    tb, l1, hd = out_ref.shape           # (batch_tile, L1, HD)
    l2 = x2_ref.shape[0] // tb
    nhid = x1_ref.shape[1]
    mxu_dtype = x1_ref.dtype             # bf16 in -> bf16 MXU operands, f32 accum

    # ---- Q/K/V projections for this head: batch fills the MXU M dimension ----
    scale = jnp.float32(1.0 / math.sqrt(nhid))       # q / sqrt(H), H == nhid
    q = jnp.dot(x1_ref[...], wq_ref[...], preferred_element_type=jnp.float32) * scale
    k = jnp.dot(x2_ref[...], wk_ref[...], preferred_element_type=jnp.float32)
    v = jnp.dot(x2_ref[...], wv_ref[...], preferred_element_type=jnp.float32)

    # Sublane-aligned split of the flattened batch dim (no (8,128) tile crossed
    # because L1/L2 are multiples of 8 whenever tb > 1).
    q = q.astype(mxu_dtype).reshape(tb, l1, hd)
    k = k.astype(mxu_dtype).reshape(tb, l2, hd)
    v = v.astype(mxu_dtype).reshape(tb, l2, hd)

    # ---- Scores: contract the last dims (no explicit transpose of k) ----
    s = jnp.einsum("bqd,bkd->bqk", q, k,
                   preferred_element_type=jnp.float32)        # (tb, L1, L2)
    s = jnp.where(mask_ref[...] > 0.0, jnp.float32(-1e8), s)  # masked_fill

    # ---- f32 softmax; normalisation deferred past the PV matmul ----
    m = jnp.max(s, axis=-1, keepdims=True)
    e = jnp.exp(s - m)
    denom = jnp.sum(e, axis=-1, keepdims=True)                # (tb, L1, 1)

    o = jnp.einsum("bqk,bkd->bqd", e.astype(mxu_dtype), v,
                   preferred_element_type=jnp.float32)        # (tb, L1, HD)
    o = o * pl.reciprocal(denom, approx=approx_reciprocal)

    out_ref[...] = o.astype(out_ref.dtype)


def msa_forward(inp1, inp2, wq, wk, wv, mask, *, nhead, head_dim,
                batch_tile=None, approx_reciprocal=False):
    """Pallas MSA forward (mode='normal', eval-mode dropout).

    batch_tile: batch elements per grid step (default: whole batch).  For large
    batches pick batch_tile so batch_tile*L1 ~ 256 rows (v6e/v7x MXU) or ~128
    (v5e), keeping B // batch_tile >= 2 if you want the batch axis (rather than
    the head axis) to feed v7x's second TensorCore.
    """
    B, L1, H = inp1.shape
    B2, L2, H2 = inp2.shape
    nout = nhead * head_dim
    assert B2 == B and H2 == H
    assert wq.shape == (H, nout) and wk.shape == (H, nout) and wv.shape == (H, nout)
    assert mask.shape == (B, 1, L2)

    if batch_tile is None:
        batch_tile = B     # tiny shapes: fewer grid steps; heads stay parallel
    tb = batch_tile
    assert B % tb == 0, "batch_tile must divide B"
    if tb > 1:
        assert L1 % 8 == 0 and L2 % 8 == 0, \
            "L1/L2 must be multiples of 8 when batching >1 sequence per step"
    if B // tb > 1:
        assert (tb * L1) % 8 == 0 and (tb * L2) % 8 == 0, \
            "flattened block rows must be sublane (8) aligned"

    # Wrapper-side layout plumbing (free): flatten batch into the matmul M
    # dimension; make the head dimension a leading, grid-indexable axis.
    # (In a real model store the params pre-arranged to skip this per call.)
    x1f = inp1.reshape(B * L1, H)
    x2f = inp2.reshape(B * L2, H)
    wqh = wq.reshape(H, nhead, head_dim).transpose(1, 0, 2)   # (NH, H, HD)
    wkh = wk.reshape(H, nhead, head_dim).transpose(1, 0, 2)
    wvh = wv.reshape(H, nhead, head_dim).transpose(1, 0, 2)

    kernel = functools.partial(_msa_head_kernel,
                               approx_reciprocal=approx_reciprocal)

    out_hm = pl.pallas_call(
        kernel,
        out_shape=jax.ShapeDtypeStruct((B, nhead, L1, head_dim), inp1.dtype),
        grid_spec=pltpu.PrefetchScalarGridSpec(
            num_scalar_prefetch=0,
            # batch outer, head inner: x1/x2/mask block indices are constant
            # across the head sweep, so Pallas keeps them resident in VMEM.
            grid=(B // tb, nhead),
            in_specs=[
                pl.BlockSpec((tb * L1, H), lambda b, h: (b, 0)),            # x1 flat
                pl.BlockSpec((tb * L2, H), lambda b, h: (b, 0)),            # x2 flat
                pl.BlockSpec((None, H, head_dim), lambda b, h: (h, 0, 0)),  # WQ head
                pl.BlockSpec((None, H, head_dim), lambda b, h: (h, 0, 0)),  # WK head
                pl.BlockSpec((None, H, head_dim), lambda b, h: (h, 0, 0)),  # WV head
                pl.BlockSpec((tb, 1, L2), lambda b, h: (b, 0, 0)),          # mask
            ],
            out_specs=pl.BlockSpec((tb, None, L1, head_dim),
                                   lambda b, h: (b, h, 0, 0)),              # head-major
        ),
        compiler_params=pltpu.CompilerParams(
            dimension_semantics=("parallel", "parallel")),
    )(x1f, x2f, wqh, wkh, wvh, mask)

    # Head-major (B, NH, L1, HD) -> PyTorch (B, L1, NH*HD); tiny wrapper-side
    # transpose (layout plumbing outside the kernel).
    return out_hm.transpose(0, 2, 1, 3).reshape(B, L1, nout)


def msa_reference(inp1, inp2, wq, wk, wv, mask, *, nhead, head_dim):
    """Pure-JAX f32 reference mirroring the PyTorch forward (eval mode)."""
    inp1 = inp1.astype(jnp.float32)
    inp2 = inp2.astype(jnp.float32)
    wq, wk, wv = (w.astype(jnp.float32) for w in (wq, wk, wv))
    B, L1, H = inp1.shape
    _, L2, _ = inp2.shape
    q = (inp1 @ wq) / math.sqrt(H)
    k = inp2 @ wk
    v = inp2 @ wv
    q = q.reshape(B, L1, nhead, head_dim).transpose(0, 2, 1, 3)   # (B,NH,L1,HD)
    k = k.reshape(B, L2, nhead, head_dim).transpose(0, 2, 3, 1)   # (B,NH,HD,L2)
    v = v.reshape(B, L2, nhead, head_dim).transpose(0, 2, 1, 3)   # (B,NH,L2,HD)
    pre = jnp.einsum('bnld,bndm->bnlm', q, k)                     # (B,NH,L1,L2)
    pre = jnp.where(mask[:, :, None, :] > 0.0, -1e8, pre)         # mask (B,1,L2)
    alpha = jax.nn.softmax(pre, axis=-1)
    attn = jnp.einsum('bnlm,bnmd->bnld', alpha, v)
    return attn.transpose(0, 2, 1, 3).reshape(B, L1, nhead * head_dim)


if __name__ == "__main__":
    # Small shapes consistent with the module (args.nhid, args.nhead, args.head_dim).
    B, L1, L2 = 2, 8, 16
    nhid, nhead, head_dim = 32, 4, 8
    nout = nhead * head_dim

    key = jax.random.PRNGKey(0)
    k1, k2, k3, k4, k5, k6 = jax.random.split(key, 6)

    inp1 = jax.random.normal(k1, (B, L1, nhid), dtype=jnp.float32)
    inp2 = jax.random.normal(k2, (B, L2, nhid), dtype=jnp.float32)

    # nn.Linear weights are (out, in); store transposed (in, out) for x @ W^T.
    bound = 1.0 / math.sqrt(nhid)
    wq = jax.random.uniform(k3, (nhid, nout), jnp.float32, -bound, bound)
    wk = jax.random.uniform(k4, (nhid, nout), jnp.float32, -bound, bound)
    wv = jax.random.uniform(k5, (nhid, nout), jnp.float32, -bound, bound)

    # Boolean mask: 1.0 where position is padded/masked, shape (B, 1, L2).
    mask_bool = jax.random.bernoulli(k6, p=0.25, shape=(B, L2))
    mask = mask_bool.astype(jnp.float32)[:, None, :]

    # --- f32 path (exact reciprocal), tight tolerance vs reference ---
    out = msa_forward(inp1, inp2, wq, wk, wv, mask,
                      nhead=nhead, head_dim=head_dim, approx_reciprocal=False)
    out = jax.block_until_ready(out)
    ref = msa_reference(inp1, inp2, wq, wk, wv, mask,
                        nhead=nhead, head_dim=head_dim)
    assert out.shape == (B, L1, nout)
    assert jnp.allclose(out, ref, atol=1e-4, rtol=1e-4), "f32 mismatch vs reference"

    # --- bf16 MXU-operand path (helps most on v5e's HBM bandwidth, also good
    #     on v6e/v7x): f32 accumulation + f32 softmax, EUP approximate
    #     reciprocal; loose tolerance vs f32 reference ---
    inp1_b, inp2_b = inp1.astype(jnp.bfloat16), inp2.astype(jnp.bfloat16)
    wq_b, wk_b, wv_b = (w.astype(jnp.bfloat16) for w in (wq, wk, wv))
    out_b = msa_forward(inp1_b, inp2_b, wq_b, wk_b, wv_b, mask,
                        nhead=nhead, head_dim=head_dim, approx_reciprocal=True)
    out_b = jax.block_until_ready(out_b)
    ref_b = msa_reference(inp1_b, inp2_b, wq_b, wk_b, wv_b, mask,
                          nhead=nhead, head_dim=head_dim)
    assert jnp.allclose(out_b.astype(jnp.float32), ref_b, atol=5e-2, rtol=5e-2), \
        "bf16 mismatch vs reference"

    # --- batch_tile=1 path (grid batch axis >= 2, v7x-style sharding) ---
    out_t1 = msa_forward(inp1, inp2, wq, wk, wv, mask,
                         nhead=nhead, head_dim=head_dim, batch_tile=1)
    out_t1 = jax.block_until_ready(out_t1)
    assert jnp.allclose(out_t1, ref, atol=1e-4, rtol=1e-4), \
        "batch_tile=1 mismatch vs reference"

    print("KERNEL_OK")
</pallas_src>

<mosaic_0001>
module attributes {stable_mosaic.version = 11 : i64} {
  func.func @_msa_head_kernel(%arg0: i32, %arg1: i32, %arg2: memref<16x32xf32, #tpu.memory_space<vmem>>, %arg3: memref<32x32xf32, #tpu.memory_space<vmem>>, %arg4: memref<1x32x8xf32, #tpu.memory_space<vmem>>, %arg5: memref<1x32x8xf32, #tpu.memory_space<vmem>>, %arg6: memref<1x32x8xf32, #tpu.memory_space<vmem>>, %arg7: memref<2x1x16xf32, #tpu.memory_space<vmem>>, %arg8: memref<2x1x8x8xf32, #tpu.memory_space<vmem>>) attributes {dimension_semantics = [#tpu.dimension_semantics<parallel>, #tpu.dimension_semantics<parallel>], iteration_bounds = array<i64: 1, 4>, scalar_prefetch = 0 : i64, scratch_operands = 0 : i64, tpu.core_type = #tpu.core_type<tc>, window_params = [{transform_indices = @transform_0, window_bounds = array<i64: 16, 32>}, {transform_indices = @transform_1, window_bounds = array<i64: 32, 32>}, {transform_indices = @transform_2, window_bounds = array<i64: 1, 32, 8>}, {transform_indices = @transform_3, window_bounds = array<i64: 1, 32, 8>}, {transform_indices = @transform_4, window_bounds = array<i64: 1, 32, 8>}, {transform_indices = @transform_5, window_bounds = array<i64: 2, 1, 16>}, {transform_indices = @transform_6, window_bounds = array<i64: 2, 1, 8, 8>}]} {
    %c0 = arith.constant 0 : index
    %c0_0 = arith.constant 0 : index
    %0 = vector.load %arg2[%c0, %c0_0] : memref<16x32xf32, #tpu.memory_space<vmem>>, vector<16x32xf32>
    %c0_1 = arith.constant 0 : index
    %c0_2 = arith.constant 0 : index
    %c0_3 = arith.constant 0 : index
    %1 = vector.load %arg4[%c0_1, %c0_2, %c0_3] : memref<1x32x8xf32, #tpu.memory_space<vmem>>, vector<1x32x8xf32>
    %2 = vector.shape_cast %1 : vector<1x32x8xf32> to vector<32x8xf32>
    %cst = arith.constant dense<0.000000e+00> : vector<16x8xf32>
    %3 = tpu.matmul %0, %2, %cst {dimension_numbers = #tpu.dot_dimension_numbers<[1], [0], [0], [1], [0, 0, 1, 1], [], []>} : vector<16x32xf32>, vector<32x8xf32>, vector<16x8xf32> -> vector<16x8xf32>
    %cst_4 = arith.constant 0.176776692 : f32
    %4 = vector.broadcast %cst_4 : f32 to vector<16x8xf32>
    %5 = arith.mulf %3, %4 : vector<16x8xf32>
    %c0_5 = arith.constant 0 : index
    %c0_6 = arith.constant 0 : index
    %6 = vector.load %arg3[%c0_5, %c0_6] : memref<32x32xf32, #tpu.memory_space<vmem>>, vector<32x32xf32>
    %c0_7 = arith.constant 0 : index
    %c0_8 = arith.constant 0 : index
    %c0_9 = arith.constant 0 : index
    %7 = vector.load %arg5[%c0_7, %c0_8, %c0_9] : memref<1x32x8xf32, #tpu.memory_space<vmem>>, vector<1x32x8xf32>
    %8 = vector.shape_cast %7 : vector<1x32x8xf32> to vector<32x8xf32>
    %cst_10 = arith.constant dense<0.000000e+00> : vector<32x8xf32>
    %9 = tpu.matmul %6, %8, %cst_10 {dimension_numbers = #tpu.dot_dimension_numbers<[1], [0], [0], [1], [0, 0, 1, 1], [], []>} : vector<32x32xf32>, vector<32x8xf32>, vector<32x8xf32> -> vector<32x8xf32>
    %c0_11 = arith.constant 0 : index
    %c0_12 = arith.constant 0 : index
    %10 = vector.load %arg3[%c0_11, %c0_12] : memref<32x32xf32, #tpu.memory_space<vmem>>, vector<32x32xf32>
    %c0_13 = arith.constant 0 : index
    %c0_14 = arith.constant 0 : index
    %c0_15 = arith.constant 0 : index
    %11 = vector.load %arg6[%c0_13, %c0_14, %c0_15] : memref<1x32x8xf32, #tpu.memory_space<vmem>>, vector<1x32x8xf32>
    %12 = vector.shape_cast %11 : vector<1x32x8xf32> to vector<32x8xf32>
    %cst_16 = arith.constant dense<0.000000e+00> : vector<32x8xf32>
    %13 = tpu.matmul %10, %12, %cst_16 {dimension_numbers = #tpu.dot_dimension_numbers<[1], [0], [0], [1], [0, 0, 1, 1], [], []>} : vector<32x32xf32>, vector<32x8xf32>, vector<32x8xf32> -> vector<32x8xf32>
    %14 = vector.shape_cast %5 : vector<16x8xf32> to vector<2x8x8xf32>
    %15 = vector.shape_cast %9 : vector<32x8xf32> to vector<2x16x8xf32>
    %16 = vector.shape_cast %13 : vector<32x8xf32> to vector<2x16x8xf32>
    "tpu.trace_start"() <{level = 10 : i32, message = "bqd,bkd->bqk"}> : () -> ()
    %cst_17 = arith.constant dense<0.000000e+00> : vector<2x8x16xf32>
    %17 = tpu.matmul %14, %15, %cst_17 {dimension_numbers = #tpu.dot_dimension_numbers<[2], [2], [1], [1], [0, 0, 0, 1, 1, 1], [0], [0]>} : vector<2x8x8xf32>, vector<2x16x8xf32>, vector<2x8x16xf32> -> vector<2x8x16xf32>
    "tpu.trace_stop"() : () -> ()
    %c0_18 = arith.constant 0 : index
    %c0_19 = arith.constant 0 : index
    %c0_20 = arith.constant 0 : index
    %18 = vector.load %arg7[%c0_18, %c0_19, %c0_20] : memref<2x1x16xf32, #tpu.memory_space<vmem>>, vector<2x1x16xf32>
    %cst_21 = arith.constant 0.000000e+00 : f32
    %19 = vector.broadcast %cst_21 : f32 to vector<2x1x16xf32>
    %20 = arith.cmpf ogt, %18, %19 : vector<2x1x16xf32>
    %cst_22 = arith.constant -1.000000e+08 : f32
    %21 = vector.shape_cast %20 : vector<2x1x16xi1> to vector<2x1x16xi1>
    %22 = vector.broadcast %21 : vector<2x1x16xi1> to vector<2x8x16xi1>
    %23 = vector.broadcast %cst_22 : f32 to vector<2x8x16xf32>
    %24 = arith.select %22, %23, %17 : vector<2x8x16xi1>, vector<2x8x16xf32>
    %cst_23 = arith.constant dense<0xFF800000> : vector<2x8xf32>
    %25 = vector.multi_reduction <maximumf>, %24, %cst_23 [2] : vector<2x8x16xf32> to vector<2x8xf32>
    %26 = vector.shape_cast %25 : vector<2x8xf32> to vector<2x8x1xf32>
    %27 = vector.broadcast %26 : vector<2x8x1xf32> to vector<2x8x16xf32>
    %28 = arith.subf %24, %27 : vector<2x8x16xf32>
    %29 = math.exp %28 : vector<2x8x16xf32>
    %cst_24 = arith.constant dense<0.000000e+00> : vector<2x8xf32>
    %30 = vector.multi_reduction <add>, %29, %cst_24 [2] : vector<2x8x16xf32> to vector<2x8xf32>
    %31 = vector.shape_cast %30 : vector<2x8xf32> to vector<2x8x1xf32>
    "tpu.trace_start"() <{level = 10 : i32, message = "bqk,bkd->bqd"}> : () -> ()
    %cst_25 = arith.constant dense<0.000000e+00> : vector<2x8x8xf32>
    %32 = tpu.matmul %29, %16, %cst_25 {dimension_numbers = #tpu.dot_dimension_numbers<[2], [1], [1], [2], [0, 0, 0, 1, 1, 2], [0], [0]>} : vector<2x8x16xf32>, vector<2x16x8xf32>, vector<2x8x8xf32> -> vector<2x8x8xf32>
    "tpu.trace_stop"() : () -> ()
    %33 = tpu.reciprocal %31 : vector<2x8x1xf32> -> vector<2x8x1xf32>
    %34 = vector.broadcast %33 : vector<2x8x1xf32> to vector<2x8x8xf32>
    %35 = arith.mulf %32, %34 : vector<2x8x8xf32>
    %c0_26 = arith.constant 0 : index
    %c0_27 = arith.constant 0 : index
    %c0_28 = arith.constant 0 : index
    %c0_29 = arith.constant 0 : index
    %36 = vector.load %arg8[%c0_26, %c0_27, %c0_28, %c0_29] : memref<2x1x8x8xf32, #tpu.memory_space<vmem>>, vector<2x1x8x8xf32>
    %37 = vector.shape_cast %36 : vector<2x1x8x8xf32> to vector<2x8x8xf32>
    %38 = vector.shape_cast %35 : vector<2x8x8xf32> to vector<2x1x8x8xf32>
    tpu.vector_store %arg8[%c0_26, %c0_27, %c0_28, %c0_29], %38 {strides = array<i32>} : memref<2x1x8x8xf32, #tpu.memory_space<vmem>>, vector<2x1x8x8xf32>,
    return
  }
  func.func @transform_0(%arg0: i32, %arg1: i32) -> (i32, i32) {
    %c0_i32 = arith.constant 0 : i32
    %c0_i32_0 = arith.constant 0 : i32
    return %arg0, %c0_i32 : i32, i32
  }
  func.func @transform_1(%arg0: i32, %arg1: i32) -> (i32, i32) {
    %c0_i32 = arith.constant 0 : i32
    %c0_i32_0 = arith.constant 0 : i32
    return %arg0, %c0_i32 : i32, i32
  }
  func.func @transform_2(%arg0: i32, %arg1: i32) -> (i32, i32, i32) {
    %c0_i32 = arith.constant 0 : i32
    %c0_i32_0 = arith.constant 0 : i32
    %c0_i32_1 = arith.constant 0 : i32
    return %arg1, %c0_i32, %c0_i32_0 : i32, i32, i32
  }
  func.func @transform_3(%arg0: i32, %arg1: i32) -> (i32, i32, i32) {
    %c0_i32 = arith.constant 0 : i32
    %c0_i32_0 = arith.constant 0 : i32
    %c0_i32_1 = arith.constant 0 : i32
    return %arg1, %c0_i32, %c0_i32_0 : i32, i32, i32
  }
  func.func @transform_4(%arg0: i32, %arg1: i32) -> (i32, i32, i32) {
    %c0_i32 = arith.constant 0 : i32
    %c0_i32_0 = arith.constant 0 : i32
    %c0_i32_1 = arith.constant 0 : i32
    return %arg1, %c0_i32, %c0_i32_0 : i32, i32, i32
  }
  func.func @transform_5(%arg0: i32, %arg1: i32) -> (i32, i32, i32) {
    %c0_i32 = arith.constant 0 : i32
    %c0_i32_0 = arith.constant 0 : i32
    %c0_i32_1 = arith.constant 0 : i32
    return %arg0, %c0_i32, %c0_i32_0 : i32, i32, i32
  }
  func.func @transform_6(%arg0: i32, %arg1: i32) -> (i32, i32, i32, i32) {
    %c0_i32 = arith.constant 0 : i32
    %c0_i32_0 = arith.constant 0 : i32
    %c0_i32_1 = arith.constant 0 : i32
    return %arg0, %arg1, %c0_i32, %c0_i32_0 : i32, i32, i32, i32
  }
}

</mosaic_0001>

<llo_original>
// kernel: tpu_custom_call.1
$region0: #{tpu_custom_call.1}
  #allocation0 [shape = 'u32[]', space=smem, size = 0x4, offset = 0x4, fixed_abs, tag = 'smem constant byte address 0x4 - core index']
  #allocation1 [shape = 'u32[144,128]{1,0:T(1,128)}', space=vmem, size = 0x12000, scoped, tag = 'internal scratch']
  %s0 = inlined_call_operand.vmem [shape: f32[16,32], index: 0, kind: input, shape index: {}]
  %s1 = inlined_call_operand.vmem [shape: f32[32,32], index: 1, kind: input, shape index: {}]
  %s2 = inlined_call_operand.vmem [shape: f32[4,32,8], index: 2, kind: input, shape index: {}]
  %s3 = inlined_call_operand.vmem [shape: f32[4,32,8], index: 3, kind: input, shape index: {}]
  %s4 = inlined_call_operand.vmem [shape: f32[4,32,8], index: 4, kind: input, shape index: {}]
  %s5 = inlined_call_operand.vmem [shape: f32[2,1,16], index: 5, kind: input, shape index: {}]
  %s6 = inlined_call_operand.hbm [shape: f32[2,4,8,8], index: 6, kind: output, shape index: {}]
  %s7 = sld [smem:[#allocation0]]
  $region57: #{tpu_custom_call.1} parent=0
    _
  %s9 = ssub.s32 1, %s7
  %s10 = scalar_select 0, %s9, %s7
  $region1: #{tpu_custom_call.1} parent=0
    #allocation2 [shape = 'u8[16384]{0}', space=vmem, size = 0x4000, scoped, tag = 'output window, operand 0']
    #allocation3 [shape = 's32[2]{0}', space=sflag, size = 0x8, scoped, tag = 'scoped memory for tpu_custom_call.1']
    %11 = vsyncpa [#allocation3], 0
    %s12 = scalar_lea.sflag [#allocation3], 1
    %13 = vsyncpa %s12, 0
    loop: start=0, step=1, limit=6
    $region2: #{tpu_custom_call.1} parent=1 // loop_pre_header
      _
    $region3: #{tpu_custom_call.1} parent=1 // loop_header
      %s15 = sphi 0, %s19
      %p16 = scmp.ge.s32.totalorder %s15, 6
      %s22 = sphi 0, %s34
      %s23 = sphi 0, %s30
      %s24 = sphi 0, %s22
      %s25 = sphi 0, %s23
      %s26 = sphi 0, %s24
      %s27 = sphi 0, %s25
      %s37 = sphi 0, %s39
      %s40 = sphi 0, %s37
      %s41 = sphi 0, %s40
      %s57 = sphi 0, %s41
      %s63 = sphi 0, %s65
      %s66 = sphi 0, %s63
      %s67 = sphi 0, %s66
      %s83 = sphi 0, %s67
      %s89 = sphi 0, %s91
      %s92 = sphi 0, %s89
      %s93 = sphi 0, %s92
      %s109 = sphi 0, %s93
      %s115 = sphi 0, %s117
      %s118 = sphi 0, %s115
      %s119 = sphi 0, %s118
      %s135 = sphi 0, %s119
      %s141 = sphi 0, %s143
      %s144 = sphi 0, %s141
      %s145 = sphi 0, %s144
      %s161 = sphi 0, %s145
      %s167 = sphi 0, %s169
      %s170 = sphi 0, %s167
      %s171 = sphi 0, %s170
      %s187 = sphi 0, %s171
      %s195 = sphi 0, %s197
      %s198 = sphi 0, %s195
      %s199 = sphi 0, %s198
      %s215 = sphi 0, %s199
    $region4: #{tpu_custom_call.1} parent=1 // loop_header_branch
      %18 = sbr.rel (%p16) target = $region8
    $region5: #{tpu_custom_call.1} parent=1 // loop_body
      %s20 = ssub.s32 %s15, 1
      %s21 = ssub.s32 %s15, 2
      %s28 = sadd.s32 1, %s23
      %p29 = scmp.ge.s32.totalorder %s28, 4
      %s30 = scalar_select %p29, 0, %s28
      %s31 = sadd.s32 1, %s22
      %s32 = scalar_select %p29, %s31, %s22
      %p33 = scmp.ge.s32.totalorder %s32, 1
      %s34 = scalar_select %p33, 0, %s32
      %s35 = ssub.s32 %s22, %s34
      %p36 = scmp.eq.s32.totalorder %s35, 0
      %s38 = sadd.s32 %s37, 1
      %s39 = scalar_select %p36, %s37, %s38
      %p42 = pneg %p36
      %p43 = scmp.eq.s32.totalorder %s15, 3
      %p44 = por %p42, %p43
      %p45 = scmp.ne.s32.totalorder %s37, %s40
      %p46 = scmp.eq.s32.totalorder %s15, 0
      %p47 = por %p45, %p46
      %p48 = scmp.ne.s32.totalorder %s37, %s40
      %p49 = scmp.eq.s32.totalorder %s20, 3
      %p50 = por %p48, %p49
      %p51 = scmp.ne.s32.totalorder %s40, %s41
      %p52 = scmp.eq.s32.totalorder %s20, 0
      %p53 = por %p51, %p52
      %p54 = scmp.ne.s32.totalorder %s40, %s41
      %p55 = scmp.eq.s32.totalorder %s21, 3
      %p56 = por %p54, %p55
      %p58 = scmp.ne.s32.totalorder %s41, %s57
      %p59 = scmp.eq.s32.totalorder %s21, 0
      %p60 = por %p58, %p59
      %s61 = ssub.s32 %s22, %s34
      %p62 = scmp.eq.s32.totalorder %s61, 0
      %s64 = sadd.s32 %s63, 1
      %s65 = scalar_select %p62, %s63, %s64
      %p68 = pneg %p62
      %p69 = scmp.eq.s32.totalorder %s15, 3
      %p70 = por %p68, %p69
      %p71 = scmp.ne.s32.totalorder %s63, %s66
      %p72 = scmp.eq.s32.totalorder %s15, 0
      %p73 = por %p71, %p72
      %p74 = scmp.ne.s32.totalorder %s63, %s66
      %p75 = scmp.eq.s32.totalorder %s20, 3
      %p76 = por %p74, %p75
      %p77 = scmp.ne.s32.totalorder %s66, %s67
      %p78 = scmp.eq.s32.totalorder %s20, 0
      %p79 = por %p77, %p78
      %p80 = scmp.ne.s32.totalorder %s66, %s67
      %p81 = scmp.eq.s32.totalorder %s21, 3
      %p82 = por %p80, %p81
      %p84 = scmp.ne.s32.totalorder %s67, %s83
      %p85 = scmp.eq.s32.totalorder %s21, 0
      %p86 = por %p84, %p85
      %s87 = ssub.s32 %s23, %s30
      %p88 = scmp.eq.s32.totalorder %s87, 0
      %s90 = sadd.s32 %s89, 1
      %s91 = scalar_select %p88, %s89, %s90
      %p94 = pneg %p88
      %p95 = scmp.eq.s32.totalorder %s15, 3
      %p96 = por %p94, %p95
      %p97 = scmp.ne.s32.totalorder %s89, %s92
      %p98 = scmp.eq.s32.totalorder %s15, 0
      %p99 = por %p97, %p98
      %p100 = scmp.ne.s32.totalorder %s89, %s92
      %p101 = scmp.eq.s32.totalorder %s20, 3
      %p102 = por %p100, %p101
      %p103 = scmp.ne.s32.totalorder %s92, %s93
      %p104 = scmp.eq.s32.totalorder %s20, 0
      %p105 = por %p103, %p104
      %p106 = scmp.ne.s32.totalorder %s92, %s93
      %p107 = scmp.eq.s32.totalorder %s21, 3
      %p108 = por %p106, %p107
      %p110 = scmp.ne.s32.totalorder %s93, %s109
      %p111 = scmp.eq.s32.totalorder %s21, 0
      %p112 = por %p110, %p111
      %s113 = ssub.s32 %s23, %s30
      %p114 = scmp.eq.s32.totalorder %s113, 0
      %s116 = sadd.s32 %s115, 1
      %s117 = scalar_select %p114, %s115, %s116
      %p120 = pneg %p114
      %p121 = scmp.eq.s32.totalorder %s15, 3
      %p122 = por %p120, %p121
      %p123 = scmp.ne.s32.totalorder %s115, %s118
      %p124 = scmp.eq.s32.totalorder %s15, 0
      %p125 = por %p123, %p124
      %p126 = scmp.ne.s32.totalorder %s115, %s118
      %p127 = scmp.eq.s32.totalorder %s20, 3
      %p128 = por %p126, %p127
      %p129 = scmp.ne.s32.totalorder %s118, %s119
      %p130 = scmp.eq.s32.totalorder %s20, 0
      %p131 = por %p129, %p130
      %p132 = scmp.ne.s32.totalorder %s118, %s119
      %p133 = scmp.eq.s32.totalorder %s21, 3
      %p134 = por %p132, %p133
      %p136 = scmp.ne.s32.totalorder %s119, %s135
      %p137 = scmp.eq.s32.totalorder %s21, 0
      %p138 = por %p136, %p137
      %s139 = ssub.s32 %s23, %s30
      %p140 = scmp.eq.s32.totalorder %s139, 0
      %s142 = sadd.s32 %s141, 1
      %s143 = scalar_select %p140, %s141, %s142
      %p146 = pneg %p140
      %p147 = scmp.eq.s32.totalorder %s15, 3
      %p148 = por %p146, %p147
      %p149 = scmp.ne.s32.totalorder %s141, %s144
      %p150 = scmp.eq.s32.totalorder %s15, 0
      %p151 = por %p149, %p150
      %p152 = scmp.ne.s32.totalorder %s141, %s144
      %p153 = scmp.eq.s32.totalorder %s20, 3
      %p154 = por %p152, %p153
      %p155 = scmp.ne.s32.totalorder %s144, %s145
      %p156 = scmp.eq.s32.totalorder %s20, 0
      %p157 = por %p155, %p156
      %p158 = scmp.ne.s32.totalorder %s144, %s145
      %p159 = scmp.eq.s32.totalorder %s21, 3
      %p160 = por %p158, %p159
      %p162 = scmp.ne.s32.totalorder %s145, %s161
      %p163 = scmp.eq.s32.totalorder %s21, 0
      %p164 = por %p162, %p163
      %s165 = ssub.s32 %s22, %s34
      %p166 = scmp.eq.s32.totalorder %s165, 0
      %s168 = sadd.s32 %s167, 1
      %s169 = scalar_select %p166, %s167, %s168
      %p172 = pneg %p166
      %p173 = scmp.eq.s32.totalorder %s15, 3
      %p174 = por %p172, %p173
      %p175 = scmp.ne.s32.totalorder %s167, %s170
      %p176 = scmp.eq.s32.totalorder %s15, 0
      %p177 = por %p175, %p176
      %p178 = scmp.ne.s32.totalorder %s167, %s170
      %p179 = scmp.eq.s32.totalorder %s20, 3
      %p180 = por %p178, %p179
      %p181 = scmp.ne.s32.totalorder %s170, %s171
      %p182 = scmp.eq.s32.totalorder %s20, 0
      %p183 = por %p181, %p182
      %p184 = scmp.ne.s32.totalorder %s170, %s171
      %p185 = scmp.eq.s32.totalorder %s21, 3
      %p186 = por %p184, %p185
      %p188 = scmp.ne.s32.totalorder %s171, %s187
      %p189 = scmp.eq.s32.totalorder %s21, 0
      %p190 = por %p188, %p189
      %s191 = ssub.s32 %s22, %s34
      %s192 = ssub.s32 %s23, %s30
      %s193 = sor.u32 %s191, %s192
      %p194 = scmp.eq.s32.totalorder %s193, 0
      %s196 = sadd.s32 %s195, 1
      %s197 = scalar_select %p194, %s195, %s196
      %p200 = pneg %p194
      %p201 = scmp.eq.s32.totalorder %s15, 3
      %p202 = por %p200, %p201
      %p203 = scmp.ne.s32.totalorder %s195, %s198
      %p204 = scmp.eq.s32.totalorder %s15, 0
      %p205 = por %p203, %p204
      %p206 = scmp.ne.s32.totalorder %s195, %s198
      %p207 = scmp.eq.s32.totalorder %s20, 3
      %p208 = por %p206, %p207
      %p209 = scmp.ne.s32.totalorder %s198, %s199
      %p210 = scmp.eq.s32.totalorder %s20, 0
      %p211 = por %p209, %p210
      %p212 = scmp.ne.s32.totalorder %s198, %s199
      %p213 = scmp.eq.s32.totalorder %s21, 3
      %p214 = por %p212, %p213
      %p216 = scmp.ne.s32.totalorder %s199, %s215
      %p217 = scmp.eq.s32.totalorder %s21, 0
      %p218 = por %p216, %p217
      %p219 = scmp.le.s32.totalorder 1, %s15
      %p220 = scmp.lt.s32.totalorder %s15, 5
      %p221 = pnand %p219, %p220
      %p222 = pneg %p221
      // Predicated region
      $region9: #{tpu_custom_call.1} parent=5 // pred_check
        _
      $region10: #{tpu_custom_call.1} parent=5 // pred_check_branch
        %224 = sbr.rel (%p221) target = $region12
      $region11: #{tpu_custom_call.1} parent=5 // pred_region
        %s225 = ssub.s32 %s15, 1
        // Predicated region
        $region13: #{tpu_custom_call.1} parent=11 // pred_check
          %p226 = pneg %p53
        $region14: #{tpu_custom_call.1} parent=11 // pred_check_branch
          %228 = sbr.rel (%p226) target = $region16
        $region15: #{tpu_custom_call.1} parent=11 // pred_region
          %s229 = smul.u32 2, %s24
          %p230 = scmp.lt.s32.totalorder %s229, 1
          %s231 = scalar_select %p230, %s229, 1
          %s232 = smul.addr %s231, 8
          %s233 = scalar_lea.vmem %s0, %s232
          %s234 = smul.u32 2, %s24
        $region16: #{tpu_custom_call.1} parent=11 // pred_fallthru
          _
        // Predicated region
        $region17: #{tpu_custom_call.1} parent=11 // pred_check
          %p235 = pneg %p79
        $region18: #{tpu_custom_call.1} parent=11 // pred_check_branch
          %237 = sbr.rel (%p235) target = $region20
        $region19: #{tpu_custom_call.1} parent=11 // pred_region
          %s238 = smul.u32 4, %s24
          %p239 = scmp.lt.s32.totalorder %s238, 3
          %s240 = scalar_select %p239, %s238, 3
          %s241 = smul.addr %s240, 8
          %s242 = scalar_lea.vmem %s1, %s241
          %s243 = smul.u32 4, %s24
        $region20: #{tpu_custom_call.1} parent=11 // pred_fallthru
          _
        // Predicated region
        $region21: #{tpu_custom_call.1} parent=11 // pred_check
          %p244 = pneg %p183
        $region22: #{tpu_custom_call.1} parent=11 // pred_check_branch
          %246 = sbr.rel (%p244) target = $region24
        $region23: #{tpu_custom_call.1} parent=11 // pred_region
          %s247 = smul.u32 2, %s24
          %p248 = scmp.lt.s32.totalorder %s247, 1
          %s249 = scalar_select %p248, %s247, 1
          %s250 = scalar_lea.vmem %s5, %s249
          %s251 = smul.u32 2, %s24
        $region24: #{tpu_custom_call.1} parent=11 // pred_fallthru
          _
      $region12: #{tpu_custom_call.1} parent=5 // pred_fallthru
        _
      %p252 = scmp.lt.s32.totalorder %s15, 4
      // Predicated region
      $region25: #{tpu_custom_call.1} parent=5 // pred_check
        %p253 = pneg %p252
      $region26: #{tpu_custom_call.1} parent=5 // pred_check_branch
        %255 = sbr.rel (%p253) target = $region28
      $region27: #{tpu_custom_call.1} parent=5 // pred_region
        // Predicated region
        $region29: #{tpu_custom_call.1} parent=27 // pred_check
          %p256 = pneg %p99
        $region30: #{tpu_custom_call.1} parent=27 // pred_check_branch
          %258 = sbr.rel (%p256) target = $region32
        $region31: #{tpu_custom_call.1} parent=27 // pred_region
          %p259 = scmp.lt.s32.totalorder %s23, 3
          %s260 = scalar_select %p259, %s23, 3
          %s261 = smul.addr %s260, 4
          %s262 = smul.addr %s261, 8
          %s263 = scalar_lea.vmem %s2, %s262
        $region32: #{tpu_custom_call.1} parent=27 // pred_fallthru
          _
        // Predicated region
        $region33: #{tpu_custom_call.1} parent=27 // pred_check
          %p264 = pneg %p125
        $region34: #{tpu_custom_call.1} parent=27 // pred_check_branch
          %266 = sbr.rel (%p264) target = $region36
        $region35: #{tpu_custom_call.1} parent=27 // pred_region
          %p267 = scmp.lt.s32.totalorder %s23, 3
          %s268 = scalar_select %p267, %s23, 3
          %s269 = smul.addr %s268, 4
          %s270 = smul.addr %s269, 8
          %s271 = scalar_lea.vmem %s3, %s270
        $region36: #{tpu_custom_call.1} parent=27 // pred_fallthru
          _
        // Predicated region
        $region37: #{tpu_custom_call.1} parent=27 // pred_check
          %p272 = pneg %p151
        $region38: #{tpu_custom_call.1} parent=27 // pred_check_branch
          %274 = sbr.rel (%p272) target = $region40
        $region39: #{tpu_custom_call.1} parent=27 // pred_region
          %p275 = scmp.lt.s32.totalorder %s23, 3
          %s276 = scalar_select %p275, %s23, 3
          %s277 = smul.addr %s276, 4
          %s278 = smul.addr %s277, 8
          %s279 = scalar_lea.vmem %s4, %s278
        $region40: #{tpu_custom_call.1} parent=27 // pred_fallthru
          _
      $region28: #{tpu_custom_call.1} parent=5 // pred_fallthru
        _
      %p280 = scmp.le.s32.totalorder 1, %s15
      %p281 = scmp.lt.s32.totalorder %s15, 5
      %p282 = pnand %p280, %p281
      %p283 = pneg %p282
      // Predicated region
      $region41: #{tpu_custom_call.1} parent=5 // pred_check
        _
      $region42: #{tpu_custom_call.1} parent=5 // pred_check_branch
        %285 = sbr.rel (%p282) target = $region44
      $region43: #{tpu_custom_call.1} parent=5 // pred_region
        %s286 = ssub.s32 %s15, 1
        %s287 = smul.u32 2, %s24
        %p288 = scmp.lt.s32.totalorder %s287, 1
        %s289 = scalar_select %p288, %s287, 1
        %s290 = smul.addr %s289, 8
        %s291 = scalar_lea.vmem %s0, %s290
        %p292 = pneg %p53
        %p293 = pneg %p50
        %s294 = smul.u32 4, %s24
        %p295 = scmp.lt.s32.totalorder %s294, 3
        %s296 = scalar_select %p295, %s294, 3
        %s297 = smul.addr %s296, 8
        %s298 = scalar_lea.vmem %s1, %s297
        %p299 = pneg %p79
        %p300 = pneg %p76
        %p301 = scmp.lt.s32.totalorder %s25, 3
        %s302 = scalar_select %p301, %s25, 3
        %s303 = smul.addr %s302, 4
        %s304 = smul.addr %s303, 8
        %s305 = scalar_lea.vmem %s2, %s304
        %p306 = pneg %p105
        %p307 = pneg %p102
        %p308 = scmp.lt.s32.totalorder %s25, 3
        %s309 = scalar_select %p308, %s25, 3
        %s310 = smul.addr %s309, 4
        %s311 = smul.addr %s310, 8
        %s312 = scalar_lea.vmem %s3, %s311
        %p313 = pneg %p131
        %p314 = pneg %p128
        %p315 = scmp.lt.s32.totalorder %s25, 3
        %s316 = scalar_select %p315, %s25, 3
        %s317 = smul.addr %s316, 4
        %s318 = smul.addr %s317, 8
        %s319 = scalar_lea.vmem %s4, %s318
        %p320 = pneg %p157
        %p321 = pneg %p154
        %s322 = smul.u32 2, %s24
        %p323 = scmp.lt.s32.totalorder %s322, 1
        %s324 = scalar_select %p323, %s322, 1
        %s325 = scalar_lea.vmem %s5, %s324
        %p326 = pneg %p183
        %p327 = pneg %p180
        %p328 = pneg %p211
        %p329 = pneg %p208
        %s330 = sand.u32 %s198, 1
        %s331 = scalar_lea.sflag [#allocation3], %s330
        %s332 = sand.u32 %s198, 1
        %s333 = smul.addr %s332, 16
        %s334 = scalar_lea.vmem [#allocation2], %s333
        %s335 = smul.u32 2, %s24
        %p336 = scmp.lt.s32.totalorder %s335, 1
        %s337 = scalar_select %p336, %s335, 1
        %s338 = smul.addr %s337, 8
        %s339 = scalar_lea.vmem %s0, %s338
        %s340 = smul.u32 2, %s24
        %s341 = smul.u32 4, %s24
        %p342 = scmp.lt.s32.totalorder %s341, 3
        %s343 = scalar_select %p342, %s341, 3
        %s344 = smul.addr %s343, 8
        %s345 = scalar_lea.vmem %s1, %s344
        %s346 = smul.u32 4, %s24
        %p347 = scmp.lt.s32.totalorder %s25, 3
        %s348 = scalar_select %p347, %s25, 3
        %s349 = smul.addr %s348, 4
        %s350 = smul.addr %s349, 8
        %s351 = scalar_lea.vmem %s2, %s350
        %p352 = scmp.lt.s32.totalorder %s25, 3
        %s353 = scalar_select %p352, %s25, 3
        %s354 = smul.addr %s353, 4
        %s355 = smul.addr %s354, 8
        %s356 = scalar_lea.vmem %s3, %s355
        %p357 = scmp.lt.s32.totalorder %s25, 3
        %s358 = scalar_select %p357, %s25, 3
        %s359 = smul.addr %s358, 4
        %s360 = smul.addr %s359, 8
        %s361 = scalar_lea.vmem %s4, %s360
        %s362 = smul.u32 2, %s24
        %p363 = scmp.lt.s32.totalorder %s362, 1
        %s364 = scalar_select %p363, %s362, 1
        %s365 = scalar_lea.vmem %s5, %s364
        %s366 = smul.u32 2, %s24
        %s367 = smul.u32 2, %s24
        %v368 = vld [vmem:[%s339] sm:$0xff]
        %v369 = vld [vmem:[%s339 + $0x8] sm:$0xff]
        %v370 = vld [vmem:[%s351] sm:$0xff]
        %v371 = vld [vmem:[%s351 + $0x8] sm:$0xff]
        %v372 = vld [vmem:[%s351 + $0x10] sm:$0xff]
        %v373 = vld [vmem:[%s351 + $0x18] sm:$0xff]
        %vm374 = vcmask 261120
        %v376 = vsel %vm374, %v368, 0
        %v379 = vsel %vm374, %v369, 0
        %381 = vmatprep.subr.mxu0 0.0
        %382 = vmatpush1.msra.mxu0 %v370
        %383 = vmatprep.subr.mxu0 0.0
        %384 = vmatpush1.msra.mxu0 %v371
        %385 = vmatprep.subr.mxu0 0.0
        %386 = vmatpush1.msra.mxu0 %v372
        %387 = vmatprep.subr.mxu0 0.0
        %388 = vmatpush1.msra.mxu0 %v373
        %389 = vmatprep.subr.mxu0 0.0
        %390 = vmatpush1.msra.mxu0 0.0
        %391 = vmatprep.subr.mxu0 0.0
        %392 = vmatpush1.msra.mxu0 0.0
        %393 = vmatprep.subr.mxu0 0.0
        %394 = vmatpush1.msra.mxu0 0.0
        %395 = vmatprep.subr.mxu0 0.0
        %396 = vmatpush1.msra.mxu0 0.0
        %397 = vmatprep.subr.mxu0 0.0
        %398 = vmatpush1.msra.mxu0 0.0
        %399 = vmatprep.subr.mxu0 0.0
        %400 = vmatpush1.msra.mxu0 0.0
        %401 = vmatprep.subr.mxu0 0.0
        %402 = vmatpush1.msra.mxu0 0.0
        %403 = vmatprep.subr.mxu0 0.0
        %404 = vmatpush1.msra.mxu0 0.0
        %405 = vmatprep.subr.mxu0 0.0
        %406 = vmatpush1.msra.mxu0 0.0
        %407 = vmatprep.subr.mxu0 0.0
        %408 = vmatpush1.msra.mxu0 0.0
        %409 = vmatprep.subr.mxu0 0.0
        %410 = vmatpush1.msra.mxu0 0.0
        %411 = vmatprep.subr.mxu0 0.0
        %412 = vmatpush1.msra.mxu0 0.0
        %413 = vmatprep.subr.mxu0 0.0
        %414 = vmatpush1.msra.mxu0 0.0
        %415 = vmatprep.subr.mxu0 0.0
        %416 = vmatpush1.msra.mxu0 0.0
        %417 = vmatprep.subr.mxu0 0.0
        %418 = vmatpush1.msra.mxu0 0.0
        %419 = vmatprep.subr.mxu0 0.0
        %420 = vmatpush1.msra.mxu0 0.0
        %421 = vmatprep.subr.mxu0 0.0
        %422 = vmatpush1.msra.mxu0 0.0
        %423 = vmatprep.subr.mxu0 0.0
        %424 = vmatpush1.msra.mxu0 0.0
        %425 = vmatprep.subr.mxu0 0.0
        %426 = vmatpush1.msra.mxu0 0.0
        %427 = vmatprep.subr.mxu0 0.0
        %428 = vmatpush1.msra.mxu0 0.0
        %429 = vmatprep.subr.mxu0 0.0
        %430 = vmatpush1.msra.mxu0 0.0
        %431 = vmatprep.subr.mxu0 0.0
        %432 = vmatpush1.msra.mxu0 0.0
        %433 = vmatprep.subr.mxu0 0.0
        %434 = vmatpush1.msra.mxu0 0.0
        %435 = vmatprep.subr.mxu0 0.0
        %436 = vmatpush1.msra.mxu0 0.0
        %437 = vmatprep.subr.mxu0 0.0
        %438 = vmatpush1.msra.mxu0 0.0
        %439 = vmatprep.subr.mxu0 0.0
        %440 = vmatpush1.msra.mxu0 0.0
        %441 = vmatprep.subr.mxu0 0.0
        %442 = vmatpush1.msra.mxu0 0.0
        %443 = vmatprep.subr.mxu0 0.0
        %444 = vmatpush1.msra.mxu0 0.0
        %445 = vmatprep.mubr.f32.mxu0 0.0
        %446 = vmatmul.mubr.f32.gmra.mrb[0].mxu0 %v376
        %v447 = vpop.f32.mrb[0].mxu0
        %v448 = vadd.f32 0.0, %v447
        %v449 = vpop.f32.mrb[0].mxu0
        %450 = vmatprep.mubr.f32.mxu0 0.0
        %451 = vmatmul.mubr.f32.gmra.mrb[0].mxu0 %v379
        %v452 = vpop.f32.mrb[0].mxu0
        %v453 = vadd.f32 0.0, %v452
        %v454 = vpop.f32.mrb[0].mxu0
        %455 = vdwg.mxu0
        %v456 = vmul.f32 %v448, 0.17677669
        %v457 = vmul.f32 %v453, 0.17677669
        %v458 = vld [vmem:[%s345] sm:$0xff]
        %v459 = vld [vmem:[%s345 + $0x8] sm:$0xff]
        %v460 = vld [vmem:[%s345 + $0x10] sm:$0xff]
        %v461 = vld [vmem:[%s345 + $0x18] sm:$0xff]
        %v462 = vld [vmem:[%s356] sm:$0xff]
        %v463 = vld [vmem:[%s356 + $0x8] sm:$0xff]
        %v464 = vld [vmem:[%s356 + $0x10] sm:$0xff]
        %v465 = vld [vmem:[%s356 + $0x18] sm:$0xff]
        %v467 = vsel %vm374, %v458, 0
        %v470 = vsel %vm374, %v459, 0
        %v473 = vsel %vm374, %v460, 0
        %v476 = vsel %vm374, %v461, 0
        %478 = vmatprep.subr.mxu0 0.0
        %479 = vmatpush1.msra.mxu0 %v462
        %480 = vmatprep.subr.mxu0 0.0
        %481 = vmatpush1.msra.mxu0 %v463
        %482 = vmatprep.subr.mxu0 0.0
        %483 = vmatpush1.msra.mxu0 %v464
        %484 = vmatprep.subr.mxu0 0.0
        %485 = vmatpush1.msra.mxu0 %v465
        %486 = vmatprep.subr.mxu0 0.0
        %487 = vmatpush1.msra.mxu0 0.0
        %488 = vmatprep.subr.mxu0 0.0
        %489 = vmatpush1.msra.mxu0 0.0
        %490 = vmatprep.subr.mxu0 0.0
        %491 = vmatpush1.msra.mxu0 0.0
        %492 = vmatprep.subr.mxu0 0.0
        %493 = vmatpush1.msra.mxu0 0.0
        %494 = vmatprep.subr.mxu0 0.0
        %495 = vmatpush1.msra.mxu0 0.0
        %496 = vmatprep.subr.mxu0 0.0
        %497 = vmatpush1.msra.mxu0 0.0
        %498 = vmatprep.subr.mxu0 0.0
        %499 = vmatpush1.msra.mxu0 0.0
        %500 = vmatprep.subr.mxu0 0.0
        %501 = vmatpush1.msra.mxu0 0.0
        %502 = vmatprep.subr.mxu0 0.0
        %503 = vmatpush1.msra.mxu0 0.0
        %504 = vmatprep.subr.mxu0 0.0
        %505 = vmatpush1.msra.mxu0 0.0
        %506 = vmatprep.subr.mxu0 0.0
        %507 = vmatpush1.msra.mxu0 0.0
        %508 = vmatprep.subr.mxu0 0.0
        %509 = vmatpush1.msra.mxu0 0.0
        %510 = vmatprep.subr.mxu0 0.0
        %511 = vmatpush1.msra.mxu0 0.0
        %512 = vmatprep.subr.mxu0 0.0
        %513 = vmatpush1.msra.mxu0 0.0
        %514 = vmatprep.subr.mxu0 0.0
        %515 = vmatpush1.msra.mxu0 0.0
        %516 = vmatprep.subr.mxu0 0.0
        %517 = vmatpush1.msra.mxu0 0.0
        %518 = vmatprep.subr.mxu0 0.0
        %519 = vmatpush1.msra.mxu0 0.0
        %520 = vmatprep.subr.mxu0 0.0
        %521 = vmatpush1.msra.mxu0 0.0
        %522 = vmatprep.subr.mxu0 0.0
        %523 = vmatpush1.msra.mxu0 0.0
        %524 = vmatprep.subr.mxu0 0.0
        %525 = vmatpush1.msra.mxu0 0.0
        %526 = vmatprep.subr.mxu0 0.0
        %527 = vmatpush1.msra.mxu0 0.0
        %528 = vmatprep.subr.mxu0 0.0
        %529 = vmatpush1.msra.mxu0 0.0
        %530 = vmatprep.subr.mxu0 0.0
        %531 = vmatpush1.msra.mxu0 0.0
        %532 = vmatprep.subr.mxu0 0.0
        %533 = vmatpush1.msra.mxu0 0.0
        %534 = vmatprep.subr.mxu0 0.0
        %535 = vmatpush1.msra.mxu0 0.0
        %536 = vmatprep.subr.mxu0 0.0
        %537 = vmatpush1.msra.mxu0 0.0
        %538 = vmatprep.subr.mxu0 0.0
        %539 = vmatpush1.msra.mxu0 0.0
        %540 = vmatprep.subr.mxu0 0.0
        %541 = vmatpush1.msra.mxu0 0.0
        %542 = vmatprep.mubr.f32.mxu0 0.0
        %543 = vmatmul.mubr.f32.gmra.mrb[0].mxu0 %v467
        %v544 = vpop.f32.mrb[0].mxu0
        %v545 = vadd.f32 0.0, %v544
        %v546 = vpop.f32.mrb[0].mxu0
        %547 = vmatprep.mubr.f32.mxu0 0.0
        %548 = vmatmul.mubr.f32.gmra.mrb[0].mxu0 %v470
        %v549 = vpop.f32.mrb[0].mxu0
        %v550 = vadd.f32 0.0, %v549
        %v551 = vpop.f32.mrb[0].mxu0
        %552 = vmatprep.mubr.f32.mxu0 0.0
        %553 = vmatmul.mubr.f32.gmra.mrb[0].mxu0 %v473
        %v554 = vpop.f32.mrb[0].mxu0
        %v555 = vadd.f32 0.0, %v554
        %v556 = vpop.f32.mrb[0].mxu0
        %557 = vmatprep.mubr.f32.mxu0 0.0
        %558 = vmatmul.mubr.f32.gmra.mrb[0].mxu0 %v476
        %v559 = vpop.f32.mrb[0].mxu0
        %v560 = vadd.f32 0.0, %v559
        %v561 = vpop.f32.mrb[0].mxu0
        %562 = vdwg.mxu0
        %v563 = vld [vmem:[%s361] sm:$0xff]
        %v564 = vld [vmem:[%s361 + $0x8] sm:$0xff]
        %v565 = vld [vmem:[%s361 + $0x10] sm:$0xff]
        %v566 = vld [vmem:[%s361 + $0x18] sm:$0xff]
        %567 = vmatprep.subr.mxu0 0.0
        %568 = vmatpush1.msra.mxu0 %v563
        %569 = vmatprep.subr.mxu0 0.0
        %570 = vmatpush1.msra.mxu0 %v564
        %571 = vmatprep.subr.mxu0 0.0
        %572 = vmatpush1.msra.mxu0 %v565
        %573 = vmatprep.subr.mxu0 0.0
        %574 = vmatpush1.msra.mxu0 %v566
        %575 = vmatprep.subr.mxu0 0.0
        %576 = vmatpush1.msra.mxu0 0.0
        %577 = vmatprep.subr.mxu0 0.0
        %578 = vmatpush1.msra.mxu0 0.0
        %579 = vmatprep.subr.mxu0 0.0
        %580 = vmatpush1.msra.mxu0 0.0
        %581 = vmatprep.subr.mxu0 0.0
        %582 = vmatpush1.msra.mxu0 0.0
        %583 = vmatprep.subr.mxu0 0.0
        %584 = vmatpush1.msra.mxu0 0.0
        %585 = vmatprep.subr.mxu0 0.0
        %586 = vmatpush1.msra.mxu0 0.0
        %587 = vmatprep.subr.mxu0 0.0
        %588 = vmatpush1.msra.mxu0 0.0
        %589 = vmatprep.subr.mxu0 0.0
        %590 = vmatpush1.msra.mxu0 0.0
        %591 = vmatprep.subr.mxu0 0.0
        %592 = vmatpush1.msra.mxu0 0.0
        %593 = vmatprep.subr.mxu0 0.0
        %594 = vmatpush1.msra.mxu0 0.0
        %595 = vmatprep.subr.mxu0 0.0
        %596 = vmatpush1.msra.mxu0 0.0
        %597 = vmatprep.subr.mxu0 0.0
        %598 = vmatpush1.msra.mxu0 0.0
        %599 = vmatprep.subr.mxu0 0.0
        %600 = vmatpush1.msra.mxu0 0.0
        %601 = vmatprep.subr.mxu0 0.0
        %602 = vmatpush1.msra.mxu0 0.0
        %603 = vmatprep.subr.mxu0 0.0
        %604 = vmatpush1.msra.mxu0 0.0
        %605 = vmatprep.subr.mxu0 0.0
        %606 = vmatpush1.msra.mxu0 0.0
        %607 = vmatprep.subr.mxu0 0.0
        %608 = vmatpush1.msra.mxu0 0.0
        %609 = vmatprep.subr.mxu0 0.0
        %610 = vmatpush1.msra.mxu0 0.0
        %611 = vmatprep.subr.mxu0 0.0
        %612 = vmatpush1.msra.mxu0 0.0
        %613 = vmatprep.subr.mxu0 0.0
        %614 = vmatpush1.msra.mxu0 0.0
        %615 = vmatprep.subr.mxu0 0.0
        %616 = vmatpush1.msra.mxu0 0.0
        %617 = vmatprep.subr.mxu0 0.0
        %618 = vmatpush1.msra.mxu0 0.0
        %619 = vmatprep.subr.mxu0 0.0
        %620 = vmatpush1.msra.mxu0 0.0
        %621 = vmatprep.subr.mxu0 0.0
        %622 = vmatpush1.msra.mxu0 0.0
        %623 = vmatprep.subr.mxu0 0.0
        %624 = vmatpush1.msra.mxu0 0.0
        %625 = vmatprep.subr.mxu0 0.0
        %626 = vmatpush1.msra.mxu0 0.0
        %627 = vmatprep.subr.mxu0 0.0
        %628 = vmatpush1.msra.mxu0 0.0
        %629 = vmatprep.subr.mxu0 0.0
        %630 = vmatpush1.msra.mxu0 0.0
        %631 = vmatprep.mubr.f32.mxu0 0.0
        %632 = vmatmul.mubr.f32.gmra.mrb[0].mxu0 %v467
        %v633 = vpop.f32.mrb[0].mxu0
        %v634 = vadd.f32 0.0, %v633
        %v635 = vpop.f32.mrb[0].mxu0
        %636 = vmatprep.mubr.f32.mxu0 0.0
        %637 = vmatmul.mubr.f32.gmra.mrb[0].mxu0 %v470
        %v638 = vpop.f32.mrb[0].mxu0
        %v639 = vadd.f32 0.0, %v638
        %v640 = vpop.f32.mrb[0].mxu0
        %641 = vmatprep.mubr.f32.mxu0 0.0
        %642 = vmatmul.mubr.f32.gmra.mrb[0].mxu0 %v473
        %v643 = vpop.f32.mrb[0].mxu0
        %v644 = vadd.f32 0.0, %v643
        %v645 = vpop.f32.mrb[0].mxu0
        %646 = vmatprep.mubr.f32.mxu0 0.0
        %647 = vmatmul.mubr.f32.gmra.mrb[0].mxu0 %v476
        %v648 = vpop.f32.mrb[0].mxu0
        %v649 = vadd.f32 0.0, %v648
        %v650 = vpop.f32.mrb[0].mxu0
        %651 = vdwg.mxu0
        %vm652 = vcmask 64512
        %v654 = vsel %vm652, %v456, 0
        %v657 = vsel %vm652, %v545, 0
        %v660 = vsel %vm652, %v550, 0
        %662 = vmatprep.subr.mxu0 0.0
        %663 = vmatpush1.xpose.msra.mxu0 %v657
        %664 = vmatprep.subr.mxu0 0.0
        %665 = vmatpush1.xpose.msra.mxu0 %v660
        %666 = vmatprep.subr.mxu0 0.0
        %667 = vmatpush1.xpose.msra.mxu0 0.0
        %668 = vmatprep.subr.mxu0 0.0
        %669 = vmatpush1.xpose.msra.mxu0 0.0
        %670 = vmatprep.subr.mxu0 0.0
        %671 = vmatpush1.xpose.msra.mxu0 0.0
        %672 = vmatprep.subr.mxu0 0.0
        %673 = vmatpush1.xpose.msra.mxu0 0.0
        %674 = vmatprep.subr.mxu0 0.0
        %675 = vmatpush1.xpose.msra.mxu0 0.0
        %676 = vmatprep.subr.mxu0 0.0
        %677 = vmatpush1.xpose.msra.mxu0 0.0
        %678 = vmatprep.subr.mxu0 0.0
        %679 = vmatpush1.xpose.msra.mxu0 0.0
        %680 = vmatprep.subr.mxu0 0.0
        %681 = vmatpush1.xpose.msra.mxu0 0.0
        %682 = vmatprep.subr.mxu0 0.0
        %683 = vmatpush1.xpose.msra.mxu0 0.0
        %684 = vmatprep.subr.mxu0 0.0
        %685 = vmatpush1.xpose.msra.mxu0 0.0
        %686 = vmatprep.subr.mxu0 0.0
        %687 = vmatpush1.xpose.msra.mxu0 0.0
        %688 = vmatprep.subr.mxu0 0.0
        %689 = vmatpush1.xpose.msra.mxu0 0.0
        %690 = vmatprep.subr.mxu0 0.0
        %691 = vmatpush1.xpose.msra.mxu0 0.0
        %692 = vmatprep.subr.mxu0 0.0
        %693 = vmatpush1.xpose.msra.mxu0 0.0
        %694 = vmatprep.subr.mxu0 0.0
        %695 = vmatpush1.xpose.msra.mxu0 0.0
        %696 = vmatprep.subr.mxu0 0.0
        %697 = vmatpush1.xpose.msra.mxu0 0.0
        %698 = vmatprep.subr.mxu0 0.0
        %699 = vmatpush1.xpose.msra.mxu0 0.0
        %700 = vmatprep.subr.mxu0 0.0
        %701 = vmatpush1.xpose.msra.mxu0 0.0
        %702 = vmatprep.subr.mxu0 0.0
        %703 = vmatpush1.xpose.msra.mxu0 0.0
        %704 = vmatprep.subr.mxu0 0.0
        %705 = vmatpush1.xpose.msra.mxu0 0.0
        %706 = vmatprep.subr.mxu0 0.0
        %707 = vmatpush1.xpose.msra.mxu0 0.0
        %708 = vmatprep.subr.mxu0 0.0
        %709 = vmatpush1.xpose.msra.mxu0 0.0
        %710 = vmatprep.subr.mxu0 0.0
        %711 = vmatpush1.xpose.msra.mxu0 0.0
        %712 = vmatprep.subr.mxu0 0.0
        %713 = vmatpush1.xpose.msra.mxu0 0.0
        %714 = vmatprep.subr.mxu0 0.0
        %715 = vmatpush1.xpose.msra.mxu0 0.0
        %716 = vmatprep.subr.mxu0 0.0
        %717 = vmatpush1.xpose.msra.mxu0 0.0
        %718 = vmatprep.subr.mxu0 0.0
        %719 = vmatpush1.xpose.msra.mxu0 0.0
        %720 = vmatprep.subr.mxu0 0.0
        %721 = vmatpush1.xpose.msra.mxu0 0.0
        %722 = vmatprep.subr.mxu0 0.0
        %723 = vmatpush1.xpose.msra.mxu0 0.0
        %724 = vmatprep.subr.mxu0 0.0
        %725 = vmatpush1.xpose.msra.mxu0 0.0
        %726 = vmatprep.mubr.f32.mxu0 0.0
        %727 = vmatmul.mubr.f32.gmra.mrb[0].mxu0 %v654
        %v728 = vpop.f32.mrb[0].mxu0
        %v729 = vadd.f32 0.0, %v728
        %v730 = vpop.f32.mrb[0].mxu0
        %731 = vdwg.mxu0
        %v733 = vsel %vm652, %v457, 0
        %v736 = vsel %vm652, %v555, 0
        %v739 = vsel %vm652, %v560, 0
        %741 = vmatprep.subr.mxu0 0.0
        %742 = vmatpush1.xpose.msra.mxu0 %v736
        %743 = vmatprep.subr.mxu0 0.0
        %744 = vmatpush1.xpose.msra.mxu0 %v739
        %745 = vmatprep.subr.mxu0 0.0
        %746 = vmatpush1.xpose.msra.mxu0 0.0
        %747 = vmatprep.subr.mxu0 0.0
        %748 = vmatpush1.xpose.msra.mxu0 0.0
        %749 = vmatprep.subr.mxu0 0.0
        %750 = vmatpush1.xpose.msra.mxu0 0.0
        %751 = vmatprep.subr.mxu0 0.0
        %752 = vmatpush1.xpose.msra.mxu0 0.0
        %753 = vmatprep.subr.mxu0 0.0
        %754 = vmatpush1.xpose.msra.mxu0 0.0
        %755 = vmatprep.subr.mxu0 0.0
        %756 = vmatpush1.xpose.msra.mxu0 0.0
        %757 = vmatprep.subr.mxu0 0.0
        %758 = vmatpush1.xpose.msra.mxu0 0.0
        %759 = vmatprep.subr.mxu0 0.0
        %760 = vmatpush1.xpose.msra.mxu0 0.0
        %761 = vmatprep.subr.mxu0 0.0
        %762 = vmatpush1.xpose.msra.mxu0 0.0
        %763 = vmatprep.subr.mxu0 0.0
        %764 = vmatpush1.xpose.msra.mxu0 0.0
        %765 = vmatprep.subr.mxu0 0.0
        %766 = vmatpush1.xpose.msra.mxu0 0.0
        %767 = vmatprep.subr.mxu0 0.0
        %768 = vmatpush1.xpose.msra.mxu0 0.0
        %769 = vmatprep.subr.mxu0 0.0
        %770 = vmatpush1.xpose.msra.mxu0 0.0
        %771 = vmatprep.subr.mxu0 0.0
        %772 = vmatpush1.xpose.msra.mxu0 0.0
        %773 = vmatprep.subr.mxu0 0.0
        %774 = vmatpush1.xpose.msra.mxu0 0.0
        %775 = vmatprep.subr.mxu0 0.0
        %776 = vmatpush1.xpose.msra.mxu0 0.0
        %777 = vmatprep.subr.mxu0 0.0
        %778 = vmatpush1.xpose.msra.mxu0 0.0
        %779 = vmatprep.subr.mxu0 0.0
        %780 = vmatpush1.xpose.msra.mxu0 0.0
        %781 = vmatprep.subr.mxu0 0.0
        %782 = vmatpush1.xpose.msra.mxu0 0.0
        %783 = vmatprep.subr.mxu0 0.0
        %784 = vmatpush1.xpose.msra.mxu0 0.0
        %785 = vmatprep.subr.mxu0 0.0
        %786 = vmatpush1.xpose.msra.mxu0 0.0
        %787 = vmatprep.subr.mxu0 0.0
        %788 = vmatpush1.xpose.msra.mxu0 0.0
        %789 = vmatprep.subr.mxu0 0.0
        %790 = vmatpush1.xpose.msra.mxu0 0.0
        %791 = vmatprep.subr.mxu0 0.0
        %792 = vmatpush1.xpose.msra.mxu0 0.0
        %793 = vmatprep.subr.mxu0 0.0
        %794 = vmatpush1.xpose.msra.mxu0 0.0
        %795 = vmatprep.subr.mxu0 0.0
        %796 = vmatpush1.xpose.msra.mxu0 0.0
        %797 = vmatprep.subr.mxu0 0.0
        %798 = vmatpush1.xpose.msra.mxu0 0.0
        %799 = vmatprep.subr.mxu0 0.0
        %800 = vmatpush1.xpose.msra.mxu0 0.0
        %801 = vmatprep.subr.mxu0 0.0
        %802 = vmatpush1.xpose.msra.mxu0 0.0
        %803 = vmatprep.subr.mxu0 0.0
        %804 = vmatpush1.xpose.msra.mxu0 0.0
        %805 = vmatprep.mubr.f32.mxu0 0.0
        %806 = vmatmul.mubr.f32.gmra.mrb[0].mxu0 %v733
        %v807 = vpop.f32.mrb[0].mxu0
        %v808 = vadd.f32 0.0, %v807
        %v809 = vpop.f32.mrb[0].mxu0
        %810 = vdwg.mxu0
        %v811 = vld [vmem:[%s365] sm:$0x1]
        %v812 = vld [vmem:[%s365 + $0x1] sm:$0x1]
        %vm813 = vcmp.gt.f32.partialorder %v811, 0.0
        %vm814 = vcmp.gt.f32.partialorder %v812, 0.0
        %v815 = vsel %vm813, 1, 0
        %v816 = vsel %vm814, 1, 0
        %v817 = vlaneseq
        %v818 = vshrl.u32 %v817, 7
        %v819 = vsub.s32 0, %v818
        %v820 = vrot.slane %v815, %v819
        %v821 = vlaneseq
        %v822 = vshrl.u32 %v821, 7
        %v823 = vsub.s32 0, %v822
        %v824 = vrot.slane %v816, %v823
        %vm825 = vcmp.eq.s32.totalorder %v820, 1
        %vm826 = vcmp.eq.s32.totalorder %v824, 1
        %v827 = vsel %vm825, -1e+08, %v729
        %v828 = vsel %vm826, -1e+08, %v808
        %vm829 = vcmask 130048
        %v830 = vsel %vm829, %v827, -inf
        %831 = vmax.xlane.f32.xlu0 %v830
        %v832 = vpop.xlane.xlu0 %831
        %v833 = vsel %vm829, %v828, -inf
        %834 = vmax.xlane.f32.xlu0 %v833
        %v835 = vpop.xlane.xlu0 %834
        %v836 = vsub.f32 %v827, %v832
        %v837 = vsub.f32 %v828, %v835
        %v838 = vmul.f32 %v836, 1.442695
        %v839 = vpow.pop %v838
        %v840 = vmul.f32 %v837, 1.442695
        %v841 = vpow.pop %v840
        %v842 = vsel %vm829, %v839, 0.0
        %843 = vadd.xlane.f32.xlu0 %v842
        %v844 = vpop.xlane.xlu0 %843
        %v845 = vsel %vm829, %v841, 0.0
        %846 = vadd.xlane.f32.xlu0 %v845
        %v847 = vpop.xlane.xlu0 %846
        %v849 = vsel %vm829, %v839, 0
        %851 = vmatprep.subr.mxu0 0.0
        %852 = vmatpush1.msra.mxu0 %v634
        %853 = vmatprep.subr.mxu0 0.0
        %854 = vmatpush1.msra.mxu0 %v639
        %855 = vmatprep.subr.mxu0 0.0
        %856 = vmatpush1.msra.mxu0 0.0
        %857 = vmatprep.subr.mxu0 0.0
        %858 = vmatpush1.msra.mxu0 0.0
        %859 = vmatprep.subr.mxu0 0.0
        %860 = vmatpush1.msra.mxu0 0.0
        %861 = vmatprep.subr.mxu0 0.0
        %862 = vmatpush1.msra.mxu0 0.0
        %863 = vmatprep.subr.mxu0 0.0
        %864 = vmatpush1.msra.mxu0 0.0
        %865 = vmatprep.subr.mxu0 0.0
        %866 = vmatpush1.msra.mxu0 0.0
        %867 = vmatprep.subr.mxu0 0.0
        %868 = vmatpush1.msra.mxu0 0.0
        %869 = vmatprep.subr.mxu0 0.0
        %870 = vmatpush1.msra.mxu0 0.0
        %871 = vmatprep.subr.mxu0 0.0
        %872 = vmatpush1.msra.mxu0 0.0
        %873 = vmatprep.subr.mxu0 0.0
        %874 = vmatpush1.msra.mxu0 0.0
        %875 = vmatprep.subr.mxu0 0.0
        %876 = vmatpush1.msra.mxu0 0.0
        %877 = vmatprep.subr.mxu0 0.0
        %878 = vmatpush1.msra.mxu0 0.0
        %879 = vmatprep.subr.mxu0 0.0
        %880 = vmatpush1.msra.mxu0 0.0
        %881 = vmatprep.subr.mxu0 0.0
        %882 = vmatpush1.msra.mxu0 0.0
        %883 = vmatprep.subr.mxu0 0.0
        %884 = vmatpush1.msra.mxu0 0.0
        %885 = vmatprep.subr.mxu0 0.0
        %886 = vmatpush1.msra.mxu0 0.0
        %887 = vmatprep.subr.mxu0 0.0
        %888 = vmatpush1.msra.mxu0 0.0
        %889 = vmatprep.subr.mxu0 0.0
        %890 = vmatpush1.msra.mxu0 0.0
        %891 = vmatprep.subr.mxu0 0.0
        %892 = vmatpush1.msra.mxu0 0.0
        %893 = vmatprep.subr.mxu0 0.0
        %894 = vmatpush1.msra.mxu0 0.0
        %895 = vmatprep.subr.mxu0 0.0
        %896 = vmatpush1.msra.mxu0 0.0
        %897 = vmatprep.subr.mxu0 0.0
        %898 = vmatpush1.msra.mxu0 0.0
        %899 = vmatprep.subr.mxu0 0.0
        %900 = vmatpush1.msra.mxu0 0.0
        %901 = vmatprep.subr.mxu0 0.0
        %902 = vmatpush1.msra.mxu0 0.0
        %903 = vmatprep.subr.mxu0 0.0
        %904 = vmatpush1.msra.mxu0 0.0
        %905 = vmatprep.subr.mxu0 0.0
        %906 = vmatpush1.msra.mxu0 0.0
        %907 = vmatprep.subr.mxu0 0.0
        %908 = vmatpush1.msra.mxu0 0.0
        %909 = vmatprep.subr.mxu0 0.0
        %910 = vmatpush1.msra.mxu0 0.0
        %911 = vmatprep.subr.mxu0 0.0
        %912 = vmatpush1.msra.mxu0 0.0
        %913 = vmatprep.subr.mxu0 0.0
        %914 = vmatpush1.msra.mxu0 0.0
        %915 = vmatprep.mubr.f32.mxu0 0.0
        %916 = vmatmul.mubr.f32.gmra.mrb[0].mxu0 %v849
        %v917 = vpop.f32.mrb[0].mxu0
        %v918 = vadd.f32 0.0, %v917
        %v919 = vpop.f32.mrb[0].mxu0
        %920 = vdwg.mxu0
        %v922 = vsel %vm829, %v841, 0
        %924 = vmatprep.subr.mxu0 0.0
        %925 = vmatpush1.msra.mxu0 %v644
        %926 = vmatprep.subr.mxu0 0.0
        %927 = vmatpush1.msra.mxu0 %v649
        %928 = vmatprep.subr.mxu0 0.0
        %929 = vmatpush1.msra.mxu0 0.0
        %930 = vmatprep.subr.mxu0 0.0
        %931 = vmatpush1.msra.mxu0 0.0
        %932 = vmatprep.subr.mxu0 0.0
        %933 = vmatpush1.msra.mxu0 0.0
        %934 = vmatprep.subr.mxu0 0.0
        %935 = vmatpush1.msra.mxu0 0.0
        %936 = vmatprep.subr.mxu0 0.0
        %937 = vmatpush1.msra.mxu0 0.0
        %938 = vmatprep.subr.mxu0 0.0
        %939 = vmatpush1.msra.mxu0 0.0
        %940 = vmatprep.subr.mxu0 0.0
        %941 = vmatpush1.msra.mxu0 0.0
        %942 = vmatprep.subr.mxu0 0.0
        %943 = vmatpush1.msra.mxu0 0.0
        %944 = vmatprep.subr.mxu0 0.0
        %945 = vmatpush1.msra.mxu0 0.0
        %946 = vmatprep.subr.mxu0 0.0
        %947 = vmatpush1.msra.mxu0 0.0
        %948 = vmatprep.subr.mxu0 0.0
        %949 = vmatpush1.msra.mxu0 0.0
        %950 = vmatprep.subr.mxu0 0.0
        %951 = vmatpush1.msra.mxu0 0.0
        %952 = vmatprep.subr.mxu0 0.0
        %953 = vmatpush1.msra.mxu0 0.0
        %954 = vmatprep.subr.mxu0 0.0
        %955 = vmatpush1.msra.mxu0 0.0
        %956 = vmatprep.subr.mxu0 0.0
        %957 = vmatpush1.msra.mxu0 0.0
        %958 = vmatprep.subr.mxu0 0.0
        %959 = vmatpush1.msra.mxu0 0.0
        %960 = vmatprep.subr.mxu0 0.0
        %961 = vmatpush1.msra.mxu0 0.0
        %962 = vmatprep.subr.mxu0 0.0
        %963 = vmatpush1.msra.mxu0 0.0
        %964 = vmatprep.subr.mxu0 0.0
        %965 = vmatpush1.msra.mxu0 0.0
        %966 = vmatprep.subr.mxu0 0.0
        %967 = vmatpush1.msra.mxu0 0.0
        %968 = vmatprep.subr.mxu0 0.0
        %969 = vmatpush1.msra.mxu0 0.0
        %970 = vmatprep.subr.mxu0 0.0
        %971 = vmatpush1.msra.mxu0 0.0
        %972 = vmatprep.subr.mxu0 0.0
        %973 = vmatpush1.msra.mxu0 0.0
        %974 = vmatprep.subr.mxu0 0.0
        %975 = vmatpush1.msra.mxu0 0.0
        %976 = vmatprep.subr.mxu0 0.0
        %977 = vmatpush1.msra.mxu0 0.0
        %978 = vmatprep.subr.mxu0 0.0
        %979 = vmatpush1.msra.mxu0 0.0
        %980 = vmatprep.subr.mxu0 0.0
        %981 = vmatpush1.msra.mxu0 0.0
        %982 = vmatprep.subr.mxu0 0.0
        %983 = vmatpush1.msra.mxu0 0.0
        %984 = vmatprep.subr.mxu0 0.0
        %985 = vmatpush1.msra.mxu0 0.0
        %986 = vmatprep.subr.mxu0 0.0
        %987 = vmatpush1.msra.mxu0 0.0
        %988 = vmatprep.mubr.f32.mxu0 0.0
        %989 = vmatmul.mubr.f32.gmra.mrb[0].mxu0 %v922
        %v990 = vpop.f32.mrb[0].mxu0
        %v991 = vadd.f32 0.0, %v990
        %v992 = vpop.f32.mrb[0].mxu0
        %993 = vdwg.mxu0
        %v994 = vrcp.pop %v844
        %v995 = vrcp.pop %v847
        %v996 = vmul.f32 %v918, %v994
        %v997 = vmul.f32 %v991, %v995
        %998 = vst.msk [vmem:[%s334] sm:$0xff] %vm652, %v996
        %999 = vst.msk [vmem:[%s334 + $0x8] sm:$0xff] %vm652, %v997
        %s1000 = sand.u32 %s198, 1
        %s1001 = scalar_lea.sflag [#allocation3], %s1000
        %s1002 = sand.u32 %s198, 1
        %s1003 = smul.addr %s1002, 16
        %s1004 = scalar_lea.vmem [#allocation2], %s1003
        // Predicated region
        $region45: #{tpu_custom_call.1} parent=43 // pred_check
          %p1005 = pneg %p208
        $region46: #{tpu_custom_call.1} parent=43 // pred_check_branch
          %1007 = sbr.rel (%p1005) target = $region48
        $region47: #{tpu_custom_call.1} parent=43 // pred_region
          %s1008 = smul.u32 2, %s24
          %s1010 = ssub.s32 256, 256
          %1011 = vsyncadd %s1001, %s1010
          %s1012 = smul.addr %s1008, 4
          %s1013 = sadd.s32 %s25, %s1012
          %s1014 = smul.addr %s1013, 128
          %s1015 = scalar_lea.hbm %s6, %s1014
          %s1016 = sshll.u32 %s1004, 4
          %s1017 = int_to_ptr.vmem [resolvable:$true] %s1016
          %1022 = dma.vmem_to_hbm [thread:$0]  %s1017, 256, %s1015, %s1001, 128, 512, 8
        $region48: #{tpu_custom_call.1} parent=43 // pred_fallthru
          _
      $region44: #{tpu_custom_call.1} parent=5 // pred_fallthru
        _
      %p1023 = scmp.le.s32.totalorder 2, %s15
      // Predicated region
      $region49: #{tpu_custom_call.1} parent=5 // pred_check
        %p1024 = pneg %p1023
      $region50: #{tpu_custom_call.1} parent=5 // pred_check_branch
        %1026 = sbr.rel (%p1024) target = $region52
      $region51: #{tpu_custom_call.1} parent=5 // pred_region
        %s1027 = ssub.s32 %s15, 2
        // Predicated region
        $region53: #{tpu_custom_call.1} parent=51 // pred_check
          %p1028 = pneg %p214
        $region54: #{tpu_custom_call.1} parent=51 // pred_check_branch
          %1030 = sbr.rel (%p1028) target = $region56
        $region55: #{tpu_custom_call.1} parent=51 // pred_region
          %s1031 = sand.u32 %s199, 1
          %s1032 = scalar_lea.sflag [#allocation3], %s1031
          %s1033 = sand.u32 %s199, 1
          %s1034 = smul.addr %s1033, 16
          %s1035 = scalar_lea.vmem [#allocation2], %s1034
          %1036 = dma.done %s1032, 256
        $region56: #{tpu_custom_call.1} parent=51 // pred_fallthru
          _
      $region52: #{tpu_custom_call.1} parent=5 // pred_fallthru
        _
    $region6: #{tpu_custom_call.1} parent=1 // loop_footer
      %s19 = sadd.s32 1, %s15
    $region7: #{tpu_custom_call.1} parent=1 // loop_footer_branch
      %14 = sbr.rel target = $region3
    $region8: #{tpu_custom_call.1} parent=1 // loop_exit
      _
    %1037 = vsyncpa [#allocation3], 1
    %s1038 = scalar_lea.sflag [#allocation3], 1
    %1039 = vsyncpa %s1038, 1

</llo_original>
